<compile_context>
chip_gen: v5e
topology: v5e:2x2
jax: 0.10.0
libtpu: 0.0.40
codegen_flags: <defaults>
</compile_context>

<pallas_src>
import functools

import jax
import jax.numpy as jnp
from jax.experimental import pallas as pl
from jax.experimental.pallas import tpu as pltpu

LANE = 128      # vreg lane width (last dim)
SUBLANE = 8     # vreg sublane width (second-to-last dim)
TB_MAX = 2048   # batch tile cap: fits v5e's 16 MiB default scoped VMEM (see budget above)


def _round_up(n: int, m: int) -> int:
    return ((n + m - 1) // m) * m


def _cdiv(a: int, b: int) -> int:
    return -(-a // b)


def qnet_kernel(x_ref, w1_ref, b1_ref, w2_ref, b2_ref, w3_ref, b3_ref, out_ref):
    tb = x_ref.shape[0]
    dim_obs = x_ref.shape[1]      # true (unpadded) observation dim, e.g. 4
    h1_dim = w1_ref.shape[1]      # padded hidden width (128)

    # ---- Layer 1 on the VPU in f32: contraction depth is only 4, the MXU would be idle.
    x = x_ref[...]                # (tb, dim_obs) f32
    w1 = w1_ref[...]              # (dim_obs, 128) f32
    acc = jnp.zeros((tb, h1_dim), jnp.float32)
    for k in range(dim_obs):      # static unroll over the TRUE observation dim (4)
        acc = acc + x[:, k:k + 1] * w1[k:k + 1, :]
    h1 = jnp.maximum(acc + b1_ref[...], 0.0).astype(jnp.bfloat16)

    # ---- Layers 2 & 3 on the MXU: bf16 inputs, f32 accumulation.
    h2 = jnp.dot(h1, w2_ref[...], preferred_element_type=jnp.float32) + b2_ref[...]
    h2 = jnp.maximum(h2, 0.0).astype(jnp.bfloat16)
    q = jnp.dot(h2, w3_ref[...], preferred_element_type=jnp.float32) + b3_ref[...]

    # Narrow f32 store: only the (sublane-rounded) real action columns go to HBM.
    out_ref[...] = q[:, :out_ref.shape[1]]


@functools.partial(jax.jit, static_argnames=("num_actions",))
def qnetwork_forward(x, kernel_params, *, num_actions):
    (w1, b1), (w2, b2), (w3, b3) = kernel_params
    batch, dim_obs = x.shape
    a_pad = _round_up(num_actions, SUBLANE)   # narrow output width (8)

    # Batch tiling: minimize pad waste; force >= 2 tiles (when possible) so v7x's
    # two TensorCores both get work via the "parallel" grid axis.
    n_tiles = max(_cdiv(batch, TB_MAX), 2 if batch > SUBLANE else 1)
    tb = _round_up(_cdiv(batch, n_tiles), SUBLANE)
    padded_batch = n_tiles * tb

    x_in = x.astype(jnp.float32)
    if padded_batch > batch:
        x_in = jnp.pad(x_in, ((0, padded_batch - batch), (0, 0)))

    out = pl.pallas_call(
        qnet_kernel,
        out_shape=jax.ShapeDtypeStruct((padded_batch, a_pad), jnp.float32),
        grid_spec=pltpu.PrefetchScalarGridSpec(
            num_scalar_prefetch=0,
            grid=(n_tiles,),
            in_specs=[
                pl.BlockSpec((tb, dim_obs), lambda i: (i, 0)),        # x: row-tiled, full-extent last dim
                pl.BlockSpec(w1.shape, lambda i: (0, 0)),             # weights/biases:
                pl.BlockSpec(b1.shape, lambda i: (0, 0)),             #   constant maps ->
                pl.BlockSpec(w2.shape, lambda i: (0, 0)),             #   VMEM-resident
                pl.BlockSpec(b2.shape, lambda i: (0, 0)),             #   across grid steps
                pl.BlockSpec(w3.shape, lambda i: (0, 0)),
                pl.BlockSpec(b3.shape, lambda i: (0, 0)),
            ],
            out_specs=pl.BlockSpec((tb, a_pad), lambda i: (i, 0)),    # narrow (tb, 8) f32 output
        ),
        compiler_params=pltpu.CompilerParams(
            dimension_semantics=("parallel",),
        ),
    )(x_in, w1, b1, w2, b2, w3, b3)

    # Cheap slice of a (padded_batch, 8) array (no wide-slab re-read pass anymore).
    return out[:batch, :num_actions]


def init_qnetwork_params(key, dim_observation, num_actions, hidden_sizes=(120, 84)):
    """nn.Linear-style init U(-1/sqrt(fan_in), 1/sqrt(fan_in)).

    Returns:
      kernel_params: params laid out for the Pallas kernel:
        layer 1: w1 f32 (dim_observation, 128), b1 f32 (1, 128)   (unpadded input dim)
        layer 2: w2 bf16 (128, 128),            b2 f32 (1, 128)
        layer 3: w3 bf16 (128, 128),            b3 f32 (1, 128)
        (hidden / action dims zero-padded to 128; zero pad rows/cols keep semantics exact)
      ref_params: unpadded f32 params matching the original module exactly.
    """
    h1, h2 = hidden_sizes
    h1p, h2p = _round_up(h1, LANE), _round_up(h2, LANE)
    ap = _round_up(num_actions, LANE)

    dims = [
        # (in_f, out_f, in_pad, out_pad, weight_dtype)
        (dim_observation, h1, dim_observation, h1p, jnp.float32),   # layer 1: VPU, f32
        (h1, h2, h1p, h2p, jnp.bfloat16),                           # layer 2: MXU, bf16
        (h2, num_actions, h2p, ap, jnp.bfloat16),                   # layer 3: MXU, bf16
    ]

    kernel_params, ref_params = [], []
    for in_f, out_f, ip, op, wdt in dims:
        key, kw, kb = jax.random.split(key, 3)
        bound = 1.0 / (float(in_f) ** 0.5)
        w = jax.random.uniform(kw, (in_f, out_f), jnp.float32, -bound, bound)
        b = jax.random.uniform(kb, (1, out_f), jnp.float32, -bound, bound)
        ref_params.append((w, b))

        wp = jnp.zeros((ip, op), jnp.float32).at[:in_f, :out_f].set(w).astype(wdt)
        bp = jnp.zeros((1, op), jnp.float32).at[:, :out_f].set(b)
        kernel_params.append((wp, bp))
    return kernel_params, ref_params


def qnetwork_reference_bf16(x, kernel_params, num_actions):
    """Plain-JAX mirror of the kernel numerics (f32 layer 1, bf16 MXU layers 2/3)."""
    (w1, b1), (w2, b2), (w3, b3) = kernel_params
    h1 = jnp.maximum(
        jnp.dot(x.astype(jnp.float32), w1, precision=jax.lax.Precision.HIGHEST) + b1, 0.0)
    h2 = jnp.maximum(
        jnp.dot(h1.astype(jnp.bfloat16), w2, preferred_element_type=jnp.float32) + b2, 0.0)
    q = jnp.dot(h2.astype(jnp.bfloat16), w3, preferred_element_type=jnp.float32) + b3
    return q[:, :num_actions]


def qnetwork_reference_f32(x, ref_params):
    """Exact f32 forward of the original PyTorch module."""
    (w1, b1), (w2, b2), (w3, b3) = ref_params
    hp = jax.lax.Precision.HIGHEST
    h1 = jnp.maximum(jnp.dot(x, w1, precision=hp) + b1, 0.0)
    h2 = jnp.maximum(jnp.dot(h1, w2, precision=hp) + b2, 0.0)
    return jnp.dot(h2, w3, precision=hp) + b3


if __name__ == "__main__":
    key = jax.random.PRNGKey(0)
    dim_observation = 4     # e.g. CartPole
    num_actions = 2
    batch = 8

    key, kx = jax.random.split(key)
    x = jax.random.normal(kx, (batch, dim_observation), dtype=jnp.float32)
    kernel_params, ref_params = init_qnetwork_params(key, dim_observation, num_actions)

    out = qnetwork_forward(x, kernel_params, num_actions=num_actions)
    out = jax.block_until_ready(out)
    assert out.shape == (batch, num_actions)

    # Tight check vs. a plain-JAX mirror of the kernel numerics.
    ref_bf16 = qnetwork_reference_bf16(x, kernel_params, num_actions)
    assert jnp.allclose(out, ref_bf16, atol=1e-2, rtol=1e-2), "mismatch vs bf16 mirror"

    # Loose semantic check vs. the exact f32 module forward (bf16 rounding of layers 2/3 only).
    ref_f32 = qnetwork_reference_f32(x, ref_params)
    assert jnp.allclose(out, ref_f32, atol=1e-1, rtol=1e-1), "mismatch vs f32 reference"

    print("KERNEL_OK")
</pallas_src>

<mosaic_0001>
module attributes {stable_mosaic.version = 11 : i64} {
  func.func @qnet_kernel(%arg0: i32, %arg1: memref<8x4xf32, #tpu.memory_space<vmem>>, %arg2: memref<4x128xf32, #tpu.memory_space<vmem>>, %arg3: memref<1x128xf32, #tpu.memory_space<vmem>>, %arg4: memref<128x128xbf16, #tpu.memory_space<vmem>>, %arg5: memref<1x128xf32, #tpu.memory_space<vmem>>, %arg6: memref<128x128xbf16, #tpu.memory_space<vmem>>, %arg7: memref<1x128xf32, #tpu.memory_space<vmem>>, %arg8: memref<8x8xf32, #tpu.memory_space<vmem>>) attributes {dimension_semantics = [#tpu.dimension_semantics<parallel>], iteration_bounds = array<i64: 1>, scalar_prefetch = 0 : i64, scratch_operands = 0 : i64, tpu.core_type = #tpu.core_type<tc>, window_params = [{transform_indices = @transform_0, window_bounds = array<i64: 8, 4>}, {pipeline_mode = #tpu.pipeline_mode<synchronous>, transform_indices = @transform_1, window_bounds = array<i64: 4, 128>}, {pipeline_mode = #tpu.pipeline_mode<synchronous>, transform_indices = @transform_2, window_bounds = array<i64: 1, 128>}, {pipeline_mode = #tpu.pipeline_mode<synchronous>, transform_indices = @transform_3, window_bounds = array<i64: 128, 128>}, {pipeline_mode = #tpu.pipeline_mode<synchronous>, transform_indices = @transform_4, window_bounds = array<i64: 1, 128>}, {pipeline_mode = #tpu.pipeline_mode<synchronous>, transform_indices = @transform_5, window_bounds = array<i64: 128, 128>}, {pipeline_mode = #tpu.pipeline_mode<synchronous>, transform_indices = @transform_6, window_bounds = array<i64: 1, 128>}, {transform_indices = @transform_7, window_bounds = array<i64: 8, 8>}]} {
    %c0 = arith.constant 0 : index
    %c0_0 = arith.constant 0 : index
    %0 = vector.load %arg1[%c0, %c0_0] : memref<8x4xf32, #tpu.memory_space<vmem>>, vector<8x4xf32>
    %c0_1 = arith.constant 0 : index
    %c0_2 = arith.constant 0 : index
    %1 = vector.load %arg2[%c0_1, %c0_2] : memref<4x128xf32, #tpu.memory_space<vmem>>, vector<4x128xf32>
    %cst = arith.constant 0.000000e+00 : f32
    %2 = vector.broadcast %cst : f32 to vector<8x128xf32>
    %3 = vector.extract_strided_slice %0 {offsets = [0, 0], sizes = [8, 1], strides = [1, 1]} : vector<8x4xf32> to vector<8x1xf32>
    %4 = vector.extract_strided_slice %1 {offsets = [0, 0], sizes = [1, 128], strides = [1, 1]} : vector<4x128xf32> to vector<1x128xf32>
    %5 = vector.broadcast %3 : vector<8x1xf32> to vector<8x128xf32>
    %6 = vector.broadcast %4 : vector<1x128xf32> to vector<8x128xf32>
    %7 = arith.mulf %5, %6 : vector<8x128xf32>
    %8 = arith.addf %2, %7 : vector<8x128xf32>
    %9 = vector.extract_strided_slice %0 {offsets = [0, 1], sizes = [8, 1], strides = [1, 1]} : vector<8x4xf32> to vector<8x1xf32>
    %10 = vector.extract_strided_slice %1 {offsets = [1, 0], sizes = [1, 128], strides = [1, 1]} : vector<4x128xf32> to vector<1x128xf32>
    %11 = vector.broadcast %9 : vector<8x1xf32> to vector<8x128xf32>
    %12 = vector.broadcast %10 : vector<1x128xf32> to vector<8x128xf32>
    %13 = arith.mulf %11, %12 : vector<8x128xf32>
    %14 = arith.addf %8, %13 : vector<8x128xf32>
    %15 = vector.extract_strided_slice %0 {offsets = [0, 2], sizes = [8, 1], strides = [1, 1]} : vector<8x4xf32> to vector<8x1xf32>
    %16 = vector.extract_strided_slice %1 {offsets = [2, 0], sizes = [1, 128], strides = [1, 1]} : vector<4x128xf32> to vector<1x128xf32>
    %17 = vector.broadcast %15 : vector<8x1xf32> to vector<8x128xf32>
    %18 = vector.broadcast %16 : vector<1x128xf32> to vector<8x128xf32>
    %19 = arith.mulf %17, %18 : vector<8x128xf32>
    %20 = arith.addf %14, %19 : vector<8x128xf32>
    %21 = vector.extract_strided_slice %0 {offsets = [0, 3], sizes = [8, 1], strides = [1, 1]} : vector<8x4xf32> to vector<8x1xf32>
    %22 = vector.extract_strided_slice %1 {offsets = [3, 0], sizes = [1, 128], strides = [1, 1]} : vector<4x128xf32> to vector<1x128xf32>
    %23 = vector.broadcast %21 : vector<8x1xf32> to vector<8x128xf32>
    %24 = vector.broadcast %22 : vector<1x128xf32> to vector<8x128xf32>
    %25 = arith.mulf %23, %24 : vector<8x128xf32>
    %26 = arith.addf %20, %25 : vector<8x128xf32>
    %c0_3 = arith.constant 0 : index
    %c0_4 = arith.constant 0 : index
    %27 = vector.load %arg3[%c0_3, %c0_4] : memref<1x128xf32, #tpu.memory_space<vmem>>, vector<1x128xf32>
    %28 = vector.broadcast %27 : vector<1x128xf32> to vector<8x128xf32>
    %29 = arith.addf %26, %28 : vector<8x128xf32>
    %cst_5 = arith.constant 0.000000e+00 : f32
    %30 = vector.broadcast %cst_5 : f32 to vector<8x128xf32>
    %31 = arith.maximumf %29, %30 : vector<8x128xf32>
    %32 = arith.truncf %31 : vector<8x128xf32> to vector<8x128xbf16>
    %c0_6 = arith.constant 0 : index
    %c0_7 = arith.constant 0 : index
    %33 = vector.load %arg4[%c0_6, %c0_7] : memref<128x128xbf16, #tpu.memory_space<vmem>>, vector<128x128xbf16>
    %cst_8 = arith.constant dense<0.000000e+00> : vector<8x128xf32>
    %34 = tpu.matmul %32, %33, %cst_8 {dimension_numbers = #tpu.dot_dimension_numbers<[1], [0], [0], [1], [0, 0, 1, 1], [], []>} : vector<8x128xbf16>, vector<128x128xbf16>, vector<8x128xf32> -> vector<8x128xf32>
    %c0_9 = arith.constant 0 : index
    %c0_10 = arith.constant 0 : index
    %35 = vector.load %arg5[%c0_9, %c0_10] : memref<1x128xf32, #tpu.memory_space<vmem>>, vector<1x128xf32>
    %36 = vector.broadcast %35 : vector<1x128xf32> to vector<8x128xf32>
    %37 = arith.addf %34, %36 : vector<8x128xf32>
    %cst_11 = arith.constant 0.000000e+00 : f32
    %38 = vector.broadcast %cst_11 : f32 to vector<8x128xf32>
    %39 = arith.maximumf %37, %38 : vector<8x128xf32>
    %40 = arith.truncf %39 : vector<8x128xf32> to vector<8x128xbf16>
    %c0_12 = arith.constant 0 : index
    %c0_13 = arith.constant 0 : index
    %41 = vector.load %arg6[%c0_12, %c0_13] : memref<128x128xbf16, #tpu.memory_space<vmem>>, vector<128x128xbf16>
    %cst_14 = arith.constant dense<0.000000e+00> : vector<8x128xf32>
    %42 = tpu.matmul %40, %41, %cst_14 {dimension_numbers = #tpu.dot_dimension_numbers<[1], [0], [0], [1], [0, 0, 1, 1], [], []>} : vector<8x128xbf16>, vector<128x128xbf16>, vector<8x128xf32> -> vector<8x128xf32>
    %c0_15 = arith.constant 0 : index
    %c0_16 = arith.constant 0 : index
    %43 = vector.load %arg7[%c0_15, %c0_16] : memref<1x128xf32, #tpu.memory_space<vmem>>, vector<1x128xf32>
    %44 = vector.broadcast %43 : vector<1x128xf32> to vector<8x128xf32>
    %45 = arith.addf %42, %44 : vector<8x128xf32>
    %46 = vector.extract_strided_slice %45 {offsets = [0, 0], sizes = [8, 8], strides = [1, 1]} : vector<8x128xf32> to vector<8x8xf32>
    %c0_17 = arith.constant 0 : index
    %c0_18 = arith.constant 0 : index
    %47 = vector.load %arg8[%c0_17, %c0_18] : memref<8x8xf32, #tpu.memory_space<vmem>>, vector<8x8xf32>
    tpu.vector_store %arg8[%c0_17, %c0_18], %46 {strides = array<i32>} : memref<8x8xf32, #tpu.memory_space<vmem>>, vector<8x8xf32>,
    return
  }
  func.func @transform_0(%arg0: i32) -> (i32, i32) {
    %c0_i32 = arith.constant 0 : i32
    %c0_i32_0 = arith.constant 0 : i32
    return %arg0, %c0_i32 : i32, i32
  }
  func.func @transform_1(%arg0: i32) -> (i32, i32) {
    %c0_i32 = arith.constant 0 : i32
    %c0_i32_0 = arith.constant 0 : i32
    %c0_i32_1 = arith.constant 0 : i32
    return %c0_i32, %c0_i32_0 : i32, i32
  }
  func.func @transform_2(%arg0: i32) -> (i32, i32) {
    %c0_i32 = arith.constant 0 : i32
    %c0_i32_0 = arith.constant 0 : i32
    %c0_i32_1 = arith.constant 0 : i32
    return %c0_i32, %c0_i32_0 : i32, i32
  }
  func.func @transform_3(%arg0: i32) -> (i32, i32) {
    %c0_i32 = arith.constant 0 : i32
    %c0_i32_0 = arith.constant 0 : i32
    %c0_i32_1 = arith.constant 0 : i32
    return %c0_i32, %c0_i32_0 : i32, i32
  }
  func.func @transform_4(%arg0: i32) -> (i32, i32) {
    %c0_i32 = arith.constant 0 : i32
    %c0_i32_0 = arith.constant 0 : i32
    %c0_i32_1 = arith.constant 0 : i32
    return %c0_i32, %c0_i32_0 : i32, i32
  }
  func.func @transform_5(%arg0: i32) -> (i32, i32) {
    %c0_i32 = arith.constant 0 : i32
    %c0_i32_0 = arith.constant 0 : i32
    %c0_i32_1 = arith.constant 0 : i32
    return %c0_i32, %c0_i32_0 : i32, i32
  }
  func.func @transform_6(%arg0: i32) -> (i32, i32) {
    %c0_i32 = arith.constant 0 : i32
    %c0_i32_0 = arith.constant 0 : i32
    %c0_i32_1 = arith.constant 0 : i32
    return %c0_i32, %c0_i32_0 : i32, i32
  }
  func.func @transform_7(%arg0: i32) -> (i32, i32) {
    %c0_i32 = arith.constant 0 : i32
    %c0_i32_0 = arith.constant 0 : i32
    return %arg0, %c0_i32 : i32, i32
  }
}

</mosaic_0001>

<llo_original>
// kernel: qnetwork_forward.1
$region0: #{qnetwork_forward.1}
  #allocation0 [shape = 'u32[]', space=smem, size = 0x4, offset = 0x4, fixed_abs, tag = 'smem constant byte address 0x4 - core index']
  #allocation1 [shape = 'u32[72,128]{1,0:T(1,128)}', space=vmem, size = 0x9000, scoped, tag = 'internal scratch']
  %s0 = inlined_call_operand.vmem [shape: f32[8,4], index: 0, kind: input, shape index: {}]
  %s1 = inlined_call_operand.vmem [shape: f32[4,128], index: 1, kind: input, shape index: {}]
  %s2 = inlined_call_operand.vmem [shape: f32[1,128], index: 2, kind: input, shape index: {}]
  %s3 = inlined_call_operand.hbm [shape: bf16[128,128], index: 3, kind: input, shape index: {}]
  %s4 = inlined_call_operand.vmem [shape: f32[1,128], index: 4, kind: input, shape index: {}]
  %s5 = inlined_call_operand.hbm [shape: bf16[128,128], index: 5, kind: input, shape index: {}]
  %s6 = inlined_call_operand.vmem [shape: f32[1,128], index: 6, kind: input, shape index: {}]
  %s7 = inlined_call_operand.vmem [shape: f32[8,8], index: 7, kind: output, shape index: {}]
  %s8 = sld [smem:[#allocation0]]
  $region46: #{qnetwork_forward.1} parent=0
    _
  %s10 = ssub.s32 1, %s8
  %s11 = scalar_select 0, %s10, %s8
  $region1: #{qnetwork_forward.1} parent=0
    #allocation2 [shape = 'u8[32768]{0}', space=vmem, size = 0x8000, scoped, tag = 'input window, operand 3, single buffered']
    #allocation3 [shape = 's32[1]{0}', space=sflag, size = 0x4, scoped, tag = 'scoped memory for qnetwork_forward.1']
    #allocation4 [shape = 'u8[32768]{0}', space=vmem, size = 0x8000, scoped, tag = 'input window, operand 5, single buffered']
    #allocation5 [shape = 's32[1]{0}', space=sflag, size = 0x4, scoped, tag = 'scoped memory for qnetwork_forward.1']
    %12 = vsyncpa [#allocation3], 0
    %13 = vsyncpa [#allocation5], 0
    // Predicated region
    $region2: #{qnetwork_forward.1} parent=1 // pred_check
      _
    $region3: #{qnetwork_forward.1} parent=1 // pred_check_branch
      %15 = sbr.rel (0) target = $region5
    $region4: #{qnetwork_forward.1} parent=1 // pred_region
      _
    $region5: #{qnetwork_forward.1} parent=1 // pred_fallthru
      _
    // Predicated region
    $region6: #{qnetwork_forward.1} parent=1 // pred_check
      _
    $region7: #{qnetwork_forward.1} parent=1 // pred_check_branch
      %17 = sbr.rel (0) target = $region9
    $region8: #{qnetwork_forward.1} parent=1 // pred_region
      _
    $region9: #{qnetwork_forward.1} parent=1 // pred_fallthru
      _
    // Predicated region
    $region10: #{qnetwork_forward.1} parent=1 // pred_check
      _
    $region11: #{qnetwork_forward.1} parent=1 // pred_check_branch
      %19 = sbr.rel (0) target = $region13
    $region12: #{qnetwork_forward.1} parent=1 // pred_region
      _
    $region13: #{qnetwork_forward.1} parent=1 // pred_fallthru
      _
    // Predicated region
    $region14: #{qnetwork_forward.1} parent=1 // pred_check
      _
    $region15: #{qnetwork_forward.1} parent=1 // pred_check_branch
      %21 = sbr.rel (0) target = $region17
    $region16: #{qnetwork_forward.1} parent=1 // pred_region
      %23 = vsyncadd [#allocation3], 0
      %s24 = sshll.u32 %s3, 4
      %s25 = int_to_ptr.hbm [resolvable:$true] %s24
      %s26 = sshll.u32 [#allocation2], 4
      %s27 = int_to_ptr.vmem [resolvable:$true] %s26
      %32 = dma.hbm_to_vmem [thread:$0]  %s25, 1024, %s27, [#allocation3], 64, 64, 4
    $region17: #{qnetwork_forward.1} parent=1 // pred_fallthru
      _
    // Predicated region
    $region18: #{qnetwork_forward.1} parent=1 // pred_check
      _
    $region19: #{qnetwork_forward.1} parent=1 // pred_check_branch
      %34 = sbr.rel (0) target = $region21
    $region20: #{qnetwork_forward.1} parent=1 // pred_region
      _
    $region21: #{qnetwork_forward.1} parent=1 // pred_fallthru
      _
    // Predicated region
    $region22: #{qnetwork_forward.1} parent=1 // pred_check
      _
    $region23: #{qnetwork_forward.1} parent=1 // pred_check_branch
      %36 = sbr.rel (0) target = $region25
    $region24: #{qnetwork_forward.1} parent=1 // pred_region
      %38 = vsyncadd [#allocation5], 0
      %s39 = sshll.u32 %s5, 4
      %s40 = int_to_ptr.hbm [resolvable:$true] %s39
      %s41 = sshll.u32 [#allocation4], 4
      %s42 = int_to_ptr.vmem [resolvable:$true] %s41
      %47 = dma.hbm_to_vmem [thread:$0]  %s40, 1024, %s42, [#allocation5], 64, 64, 4
    $region25: #{qnetwork_forward.1} parent=1 // pred_fallthru
      _
    // Predicated region
    $region26: #{qnetwork_forward.1} parent=1 // pred_check
      _
    $region27: #{qnetwork_forward.1} parent=1 // pred_check_branch
      %49 = sbr.rel (0) target = $region29
    $region28: #{qnetwork_forward.1} parent=1 // pred_region
      _
    $region29: #{qnetwork_forward.1} parent=1 // pred_fallthru
      _
    // Predicated region
    $region30: #{qnetwork_forward.1} parent=1 // pred_check
      _
    $region31: #{qnetwork_forward.1} parent=1 // pred_check_branch
      %51 = sbr.rel (0) target = $region33
    $region32: #{qnetwork_forward.1} parent=1 // pred_region
      %53 = dma.done [#allocation3], 1024
    $region33: #{qnetwork_forward.1} parent=1 // pred_fallthru
      _
    // Predicated region
    $region34: #{qnetwork_forward.1} parent=1 // pred_check
      _
    $region35: #{qnetwork_forward.1} parent=1 // pred_check_branch
      %55 = sbr.rel (0) target = $region37
    $region36: #{qnetwork_forward.1} parent=1 // pred_region
      %57 = dma.done [#allocation5], 1024
    $region37: #{qnetwork_forward.1} parent=1 // pred_fallthru
      _
    %v58 = vld [vmem:[%s0] sm:$0xff]
    %v59 = vld [vmem:[%s1] sm:$0xf]
    %61 = vset.pattern.permute.xlu0 0
    %62 = vperm.xlu0 %61, %v58
    %v63 = vpop.permute.xlu0 %62
    %v65 = vperm.slane %v59, 0
    %v66 = vmul.f32 %v63, %v65
    %v67 = vadd.f32 %v66, 0.0
    %68 = vset.pattern.permute.xlu0 1
    %69 = vperm.xlu0 %68, %v58
    %v70 = vpop.permute.xlu0 %69
    %v72 = vperm.slane %v59, 1
    %v73 = vmul.f32 %v70, %v72
    %v74 = vadd.f32 %v67, %v73
    %75 = vset.pattern.permute.xlu0 2
    %76 = vperm.xlu0 %75, %v58
    %v77 = vpop.permute.xlu0 %76
    %v79 = vperm.slane %v59, 2
    %v80 = vmul.f32 %v77, %v79
    %v81 = vadd.f32 %v74, %v80
    %82 = vset.pattern.permute.xlu0 3
    %83 = vperm.xlu0 %82, %v58
    %v84 = vpop.permute.xlu0 %83
    %v86 = vperm.slane %v59, 3
    %v87 = vmul.f32 %v84, %v86
    %v88 = vadd.f32 %v81, %v87
    %v89 = vld [vmem:[%s2] sm:$0x1]
    %v91 = vperm.slane %v89, 0
    %v93 = vadd.f32 %v88, %v91
    %v94 = vmax.f32 %v93, 0.0
    %v95 = vpack.c.bf16 %v94, %v94
    %v96 = vld [vmem:[#allocation2] sm:$0xf]
    %v97 = vld [vmem:[#allocation2 + $0x4] sm:$0xf]
    %v98 = vld [vmem:[#allocation2 + $0x8] sm:$0xf]
    %v99 = vld [vmem:[#allocation2 + $0xc] sm:$0xf]
    %v100 = vld [vmem:[#allocation2 + $0x10] sm:$0xf]
    %v101 = vld [vmem:[#allocation2 + $0x14] sm:$0xf]
    %v102 = vld [vmem:[#allocation2 + $0x18] sm:$0xf]
    %v103 = vld [vmem:[#allocation2 + $0x1c] sm:$0xf]
    %v104 = vld [vmem:[#allocation2 + $0x20] sm:$0xf]
    %v105 = vld [vmem:[#allocation2 + $0x24] sm:$0xf]
    %v106 = vld [vmem:[#allocation2 + $0x28] sm:$0xf]
    %v107 = vld [vmem:[#allocation2 + $0x2c] sm:$0xf]
    %v108 = vld [vmem:[#allocation2 + $0x30] sm:$0xf]
    %v109 = vld [vmem:[#allocation2 + $0x34] sm:$0xf]
    %v110 = vld [vmem:[#allocation2 + $0x38] sm:$0xf]
    %v111 = vld [vmem:[#allocation2 + $0x3c] sm:$0xf]
    %v112 = vld [vmem:[%s4] sm:$0x1]
    %v114 = vperm.slane %v112, 0
    %v132 = vunpack.c.l.b16 %v96
    %v133 = vunpack.c.l.b16 %v97
    %v134 = vunpack.c.l.b16 %v98
    %v135 = vunpack.c.l.b16 %v99
    %v136 = vunpack.c.l.b16 %v100
    %v137 = vunpack.c.l.b16 %v101
    %v138 = vunpack.c.l.b16 %v102
    %v139 = vunpack.c.l.b16 %v103
    %v140 = vunpack.c.l.b16 %v104
    %v141 = vunpack.c.l.b16 %v105
    %v142 = vunpack.c.l.b16 %v106
    %v143 = vunpack.c.l.b16 %v107
    %v144 = vunpack.c.l.b16 %v108
    %v145 = vunpack.c.l.b16 %v109
    %v146 = vunpack.c.l.b16 %v110
    %v147 = vunpack.c.l.b16 %v111
    %v148 = vpack.c.b16 %v133, %v132
    %v149 = vpack.c.b16 %v135, %v134
    %v150 = vpack.c.b16 %v137, %v136
    %v151 = vpack.c.b16 %v139, %v138
    %v152 = vpack.c.b16 %v141, %v140
    %v153 = vpack.c.b16 %v143, %v142
    %v154 = vpack.c.b16 %v145, %v144
    %v155 = vpack.c.b16 %v147, %v146
    %164 = vmatpush.bf16.msra.mxu0 %v155
    %165 = vmatpush.bf16.msra.mxu0 %v154
    %166 = vmatpush.bf16.msra.mxu0 %v153
    %167 = vmatpush.bf16.msra.mxu0 %v152
    %168 = vmatpush.bf16.msra.mxu0 %v151
    %169 = vmatpush.bf16.msra.mxu0 %v150
    %170 = vmatpush.bf16.msra.mxu0 %v149
    %171 = vmatpush.bf16.msra.mxu0 %v148
    %172 = vmatmul.bf16.gmra.mxu0 %v95
    %v173 = vpop.f32.mrf.mxu0
    %v174 = vadd.f32 %v114, %v173
    %v175 = vpop.f32.mrf.mxu0
    %176 = vdwg.mxu0
    %v177 = vmax.f32 %v174, 0.0
    %v178 = vpack.c.bf16 %v177, %v177
    %v179 = vld [vmem:[#allocation4] sm:$0xf]
    %v180 = vld [vmem:[#allocation4 + $0x4] sm:$0xf]
    %v181 = vld [vmem:[#allocation4 + $0x8] sm:$0xf]
    %v182 = vld [vmem:[#allocation4 + $0xc] sm:$0xf]
    %v183 = vld [vmem:[#allocation4 + $0x10] sm:$0xf]
    %v184 = vld [vmem:[#allocation4 + $0x14] sm:$0xf]
    %v185 = vld [vmem:[#allocation4 + $0x18] sm:$0xf]
    %v186 = vld [vmem:[#allocation4 + $0x1c] sm:$0xf]
    %v187 = vld [vmem:[#allocation4 + $0x20] sm:$0xf]
    %v188 = vld [vmem:[#allocation4 + $0x24] sm:$0xf]
    %v189 = vld [vmem:[#allocation4 + $0x28] sm:$0xf]
    %v190 = vld [vmem:[#allocation4 + $0x2c] sm:$0xf]
    %v191 = vld [vmem:[#allocation4 + $0x30] sm:$0xf]
    %v192 = vld [vmem:[#allocation4 + $0x34] sm:$0xf]
    %v193 = vld [vmem:[#allocation4 + $0x38] sm:$0xf]
    %v194 = vld [vmem:[#allocation4 + $0x3c] sm:$0xf]
    %v195 = vld [vmem:[%s6] sm:$0x1]
    %v197 = vperm.slane %v195, 0
    %v215 = vunpack.c.l.b16 %v179
    %v216 = vunpack.c.l.b16 %v180
    %v217 = vunpack.c.l.b16 %v181
    %v218 = vunpack.c.l.b16 %v182
    %v219 = vunpack.c.l.b16 %v183
    %v220 = vunpack.c.l.b16 %v184
    %v221 = vunpack.c.l.b16 %v185
    %v222 = vunpack.c.l.b16 %v186
    %v223 = vunpack.c.l.b16 %v187
    %v224 = vunpack.c.l.b16 %v188
    %v225 = vunpack.c.l.b16 %v189
    %v226 = vunpack.c.l.b16 %v190
    %v227 = vunpack.c.l.b16 %v191
    %v228 = vunpack.c.l.b16 %v192
    %v229 = vunpack.c.l.b16 %v193
    %v230 = vunpack.c.l.b16 %v194
    %v231 = vpack.c.b16 %v216, %v215
    %v232 = vpack.c.b16 %v218, %v217
    %v233 = vpack.c.b16 %v220, %v219
    %v234 = vpack.c.b16 %v222, %v221
    %v235 = vpack.c.b16 %v224, %v223
    %v236 = vpack.c.b16 %v226, %v225
    %v237 = vpack.c.b16 %v228, %v227
    %v238 = vpack.c.b16 %v230, %v229
    %247 = vmatpush.bf16.msra.mxu0 %v238
    %248 = vmatpush.bf16.msra.mxu0 %v237
    %249 = vmatpush.bf16.msra.mxu0 %v236
    %250 = vmatpush.bf16.msra.mxu0 %v235
    %251 = vmatpush.bf16.msra.mxu0 %v234
    %252 = vmatpush.bf16.msra.mxu0 %v233
    %253 = vmatpush.bf16.msra.mxu0 %v232
    %254 = vmatpush.bf16.msra.mxu0 %v231
    %255 = vmatmul.bf16.gmra.mxu0 %v178
    %v256 = vpop.f32.mrf.mxu0
    %v257 = vadd.f32 %v197, %v256
    %v258 = vpop.f32.mrf.mxu0
    %259 = vdwg.mxu0
    %vm260 = vcmask 64512
    %261 = vst.msk [vmem:[%s7] sm:$0xff] %vm260, %v257
    // Predicated region
    $region38: #{qnetwork_forward.1} parent=1 // pred_check
      _
    $region39: #{qnetwork_forward.1} parent=1 // pred_check_branch
      %263 = sbr.rel (0) target = $region41
    $region40: #{qnetwork_forward.1} parent=1 // pred_region
      _
    $region41: #{qnetwork_forward.1} parent=1 // pred_fallthru
      _
    // Predicated region
    $region42: #{qnetwork_forward.1} parent=1 // pred_check
      _
    $region43: #{qnetwork_forward.1} parent=1 // pred_check_branch
      %265 = sbr.rel (0) target = $region45
    $region44: #{qnetwork_forward.1} parent=1 // pred_region
      _
    $region45: #{qnetwork_forward.1} parent=1 // pred_fallthru
      _
    %266 = vsyncpa [#allocation3], 1
    %267 = vsyncpa [#allocation5], 1

</llo_original>
